<compile_context>
chip_gen: v7x
topology: tpu7x:2x2x1
jax: 0.10.0
libtpu: 0.0.40
codegen_flags: <defaults>
</compile_context>

<pallas_src>
import functools

import numpy as np

import jax
import jax.numpy as jnp
from jax.experimental import pallas as pl
from jax.experimental.pallas import tpu as pltpu


# --------------------------------------------------------------------------
# Kernel
# --------------------------------------------------------------------------
def _hvo_loss_kernel(pred_ref, target_ref, is_hit_ref, sel_ref, acc_ref, *,
                     penalty: float, n_rows: int, tile_rows: int,
                     tiles_per_split: int, use_penalty: bool):
    c = pl.program_id(0)   # per-core split (parallel axis)
    j = pl.program_id(1)   # streaming axis over row tiles

    @pl.when(j == 0)
    def _init():
        acc_ref[...] = jnp.zeros_like(acc_ref)

    p = pred_ref[...].astype(jnp.float32)     # (tile_rows, W)
    t = target_ref[...].astype(jnp.float32)   # (tile_rows, W)
    hit = is_hit_ref[...] > 0.5               # (1, W) bool, broadcast over rows

    def contribution(valid):
        pp, tt = p, t
        if valid is not None:
            # Clean OOB rows *before* exp/log1p/square so garbage (possibly
            # NaN/Inf) cannot poison the accumulator.
            pp = jnp.where(valid, pp, 0.0)
            tt = jnp.where(valid, tt, 0.0)

        # BCEWithLogitsLoss (stable): max(x,0) - x*y + log(1 + exp(-|x|))
        bce = jnp.maximum(pp, 0.0) - pp * tt + jnp.log1p(jnp.exp(-jnp.abs(pp)))
        mse = (pp - tt) * (pp - tt)
        loss = jnp.where(hit, bce, mse)       # BCE at hit cols, MSE elsewhere

        if use_penalty:
            # pen[:, col] must equal where(target_hit_of_same_pitch == 1, 1, pen).
            # Align the exact-equality indicator from the hit columns to all
            # three channel columns with a constant 0/1 selection matrix on the
            # MXU (exact for 0/1 operands; MXU is otherwise idle here).
            is_one = jnp.where(tt == 1.0, 1.0, 0.0).astype(jnp.bfloat16)
            aligned = jnp.dot(is_one, sel_ref[...],
                              preferred_element_type=jnp.float32)
            pen = jnp.where(aligned > 0.5, jnp.float32(1.0),
                            jnp.float32(penalty))
            loss = loss * pen

        if valid is not None:
            loss = jnp.where(valid, loss, 0.0)
        return loss

    row0 = (c * tiles_per_split + j) * tile_rows
    partial_tile = row0 + tile_rows > n_rows   # ragged tail / over-covered tile

    # Fast path: fully valid tile, no iota / compare / select for masking.
    @pl.when(jnp.logical_not(partial_tile))
    def _full():
        acc_ref[...] += contribution(None)

    # Slow path: only the last (or over-covered) tile pays for masking.
    @pl.when(partial_tile)
    def _ragged():
        r = jax.lax.broadcasted_iota(jnp.int32, (tile_rows, 1), 0)
        valid = r < (n_rows - row0)            # (tile_rows, 1), broadcast on lanes
        acc_ref[...] += contribution(valid)


# --------------------------------------------------------------------------
# Wrapper
# --------------------------------------------------------------------------
def _choose_fold(n: int, group_w: int, max_w: int = 576) -> int:
    """Largest-occupancy fold f (f | n): rows become (n/f, f*group_w)."""
    max_f = max(1, max_w // group_w)

    def best(cands):
        bf, bo = 1, -1.0
        for f in cands:
            w = f * group_w
            occ = w / float(pl.cdiv(w, 128) * 128)
            if occ > bo + 1e-9:
                bf, bo = f, occ
        return bf

    divs = [f for f in range(1, max_f + 1) if n % f == 0]
    pref = [f for f in divs if n // f >= 8]    # keep >= 8 rows when possible
    return best(pref) if pref else best(divs)


def _default_num_splits() -> int:
    # One accumulator per TensorCore so the "parallel" axis can shard on v7x.
    # TODO(synk): verify on v7x that the leading "parallel" axis really
    # core-shards; if not, switch to pltpu.CORE_PARALLEL / pl.core_map.
    try:
        info = pltpu.get_tpu_info()
        for name in ("num_cores", "core_count", "num_tensorcores",
                     "tensorcore_count"):
            v = getattr(info, name, None)
            if isinstance(v, int) and v >= 1:
                return max(1, min(v, 2))
    except Exception:
        pass
    return 1


def hvo_loss(pred, target, penalty: float = 1.0, *,
             tile_rows: int | None = None, num_splits: int | None = None):
    """pred, target: (B, T, 3*P), f32 or bf16. Returns dict of f32 scalars."""
    B, T, C = pred.shape
    assert C % 3 == 0, "last dim must be 3 * num_pitches"
    P = C // 3
    N = B * T
    group_w = 3 * P

    # Free reshapes only (no HBM copies): (B,T,3P) -> (n_rows, W).
    fold = _choose_fold(N, group_w)
    n_rows = N // fold
    W = fold * group_w
    pred2 = pred.reshape(n_rows, W)
    target2 = target.reshape(n_rows, W)

    lane_w = pl.cdiv(W, 128) * 128
    itemsize = jnp.dtype(pred.dtype).itemsize

    try:
        vmem_cap = pltpu.get_tpu_info().vmem_capacity_bytes
    except Exception:
        vmem_cap = 64 * 1024 * 1024   # conservative (v7x per-TC physical VMEM)

    # ~2 MiB input blocks: amortizes the ~0.35us per-step pipeline overhead.
    if tile_rows is None:
        target_blk = 2 * 1024 * 1024
        tile_rows = max(8, (target_blk // (lane_w * itemsize)) // 8 * 8)
    if tile_rows >= n_rows:
        tile_rows = n_rows
        tiles_total = 1
    else:
        tile_rows = max(8, (tile_rows // 8) * 8)
        tiles_total = pl.cdiv(n_rows, tile_rows)

    if num_splits is None:
        num_splits = _default_num_splits()
    num_splits = max(1, min(int(num_splits), tiles_total))
    tiles_per_split = pl.cdiv(tiles_total, num_splits)

    use_penalty = float(penalty) != 1.0

    # Tiny column metadata, DMA'd once and kept VMEM-resident (constant index).
    is_hit_np = np.zeros((1, W), np.float32)
    sel_np = np.zeros((W, W), np.float32)
    for k in range(fold):
        base = k * group_w
        is_hit_np[0, base:base + P] = 1.0
        for p in range(P):
            src = base + p
            sel_np[src, base + p] = 1.0
            sel_np[src, base + P + p] = 1.0
            sel_np[src, base + 2 * P + p] = 1.0
    is_hit = jnp.asarray(is_hit_np)
    sel = jnp.asarray(sel_np, dtype=jnp.bfloat16)

    kernel = functools.partial(
        _hvo_loss_kernel, penalty=float(penalty), n_rows=n_rows,
        tile_rows=tile_rows, tiles_per_split=tiles_per_split,
        use_penalty=use_penalty)

    def data_map(c, j):
        # Clamp so over-covered split tiles still DMA in-range data; the kernel
        # masks their contribution to zero.
        return (jnp.minimum(c * tiles_per_split + j, tiles_total - 1), 0)

    # VMEM budget: 2 inputs x 2 buffers + double-buffered acc + aux constants.
    in_blk = tile_rows * lane_w * itemsize
    acc_blk = tile_rows * lane_w * 4
    aux = 2 * (W * lane_w * 2) + 2 * (lane_w * 4)
    footprint = 2 * 2 * in_blk + 2 * acc_blk + aux
    vmem_limit = int(min(0.9 * vmem_cap,
                         max(footprint + (4 << 20), 16 << 20)))

    partials = pl.pallas_call(
        kernel,
        out_shape=jax.ShapeDtypeStruct((num_splits, tile_rows, W), jnp.float32),
        grid_spec=pltpu.PrefetchScalarGridSpec(
            num_scalar_prefetch=0,
            grid=(num_splits, tiles_per_split),
            in_specs=[
                pl.BlockSpec((tile_rows, W), data_map),
                pl.BlockSpec((tile_rows, W), data_map),
                pl.BlockSpec((1, W), lambda c, j: (0, 0)),
                pl.BlockSpec((W, W), lambda c, j: (0, 0)),
            ],
            # Per-split accumulator: block index depends only on the parallel
            # axis -> VMEM-resident across the streaming axis.
            out_specs=pl.BlockSpec((None, tile_rows, W),
                                   lambda c, j: (c, 0, 0)),
        ),
        compiler_params=pltpu.CompilerParams(
            dimension_semantics=("parallel", "arbitrary"),
            vmem_limit_bytes=vmem_limit,
        ),
    )(pred2, target2, is_hit, sel)

    # Final (tiny) reduction in the wrapper: rows/splits, then per-channel.
    col_sums = jnp.sum(partials, axis=(0, 1))                      # (W,)
    per_channel = col_sums.reshape(fold, 3, P).sum(axis=(0, 2))    # (3,)
    inv_n = 1.0 / float(N)
    return {
        "hits_loss": per_channel[0] * inv_n,
        "velocities_loss": per_channel[1] * inv_n,
        "offsets_loss": per_channel[2] * inv_n,
    }


# --------------------------------------------------------------------------
# Pure-JAX reference (mirrors the PyTorch module)
# --------------------------------------------------------------------------
def _hvo_loss_ref(pred, target, penalty: float = 1.0):
    B, T, C = pred.shape
    P = C // 3
    h, v, o = pred[..., :P], pred[..., P:2 * P], pred[..., 2 * P:]
    th, tv, to = target[..., :P], target[..., P:2 * P], target[..., 2 * P:]
    bce = jnp.maximum(h, 0.0) - h * th + jnp.log1p(jnp.exp(-jnp.abs(h)))
    pen = jnp.where(th == 1.0, 1.0, penalty)
    return {
        "hits_loss": jnp.mean(jnp.sum(pen * bce, axis=2)),
        "velocities_loss": jnp.mean(jnp.sum(pen * (v - tv) ** 2, axis=2)),
        "offsets_loss": jnp.mean(jnp.sum(pen * (o - to) ** 2, axis=2)),
    }


if __name__ == "__main__":
    key = jax.random.PRNGKey(0)

    def make_inputs(key, B, T, P):
        k1, k2, k3, k4 = jax.random.split(key, 4)
        pred = jax.random.normal(k1, (B, T, 3 * P), dtype=jnp.float32)
        t_hits = (jax.random.uniform(k2, (B, T, P)) > 0.5).astype(jnp.float32)
        t_vel = jax.random.uniform(k3, (B, T, P), dtype=jnp.float32)
        t_off = jax.random.uniform(k4, (B, T, P), dtype=jnp.float32) - 0.5
        return pred, jnp.concatenate([t_hits, t_vel, t_off], axis=2)

    # HVO groove: pitches=9 -> last dim = 27 (hits | velocities | offsets)
    configs = [
        dict(B=2, T=8, P=9, penalty=0.5),                    # tiny, single tile
        dict(B=3, T=11, P=9, penalty=1.0),                    # penalty==1 fast path
        dict(B=5, T=52, P=9, penalty=0.7,                     # multi-tile grid,
             tile_rows=8, num_splits=2),                      # ragged tail + splits
        dict(B=2, T=8, P=9, penalty=0.5, bf16=True),          # bf16 inputs
    ]

    for cfg in configs:
        key, sub = jax.random.split(key)
        pred, target = make_inputs(sub, cfg["B"], cfg["T"], cfg["P"])
        if cfg.get("bf16"):
            pred_k = pred.astype(jnp.bfloat16)
            target_k = target.astype(jnp.bfloat16)
            pred_r = pred_k.astype(jnp.float32)
            target_r = target_k.astype(jnp.float32)
        else:
            pred_k, target_k, pred_r, target_r = pred, target, pred, target

        out = hvo_loss(pred_k, target_k, penalty=cfg["penalty"],
                       tile_rows=cfg.get("tile_rows"),
                       num_splits=cfg.get("num_splits"))
        out = jax.tree_util.tree_map(jax.block_until_ready, out)
        ref = _hvo_loss_ref(pred_r, target_r, penalty=cfg["penalty"])
        for name in out:
            assert jnp.allclose(out[name], ref[name], rtol=1e-5, atol=1e-5), (
                cfg, name, out[name], ref[name])

    print("KERNEL_OK")
</pallas_src>

<mosaic_0001>
module attributes {stable_mosaic.version = 11 : i64} {
  func.func @_hvo_loss_kernel(%arg0: i32, %arg1: i32, %arg2: memref<8x54xf32, #tpu.memory_space<vmem>>, %arg3: memref<8x54xf32, #tpu.memory_space<vmem>>, %arg4: memref<1x54xf32, #tpu.memory_space<vmem>>, %arg5: memref<54x54xbf16, #tpu.memory_space<vmem>>, %arg6: memref<1x8x54xf32, #tpu.memory_space<vmem>>) attributes {dimension_semantics = [#tpu.dimension_semantics<parallel>, #tpu.dimension_semantics<arbitrary>], iteration_bounds = array<i64: 1, 1>, scalar_prefetch = 0 : i64, scratch_operands = 0 : i64, tpu.core_type = #tpu.core_type<tc>, window_params = [{transform_indices = @transform_0, window_bounds = array<i64: 8, 54>}, {transform_indices = @transform_1, window_bounds = array<i64: 8, 54>}, {pipeline_mode = #tpu.pipeline_mode<synchronous>, transform_indices = @transform_2, window_bounds = array<i64: 1, 54>}, {pipeline_mode = #tpu.pipeline_mode<synchronous>, transform_indices = @transform_3, window_bounds = array<i64: 54, 54>}, {transform_indices = @transform_4, window_bounds = array<i64: 1, 8, 54>}]} {
    %c0_i32 = arith.constant 0 : i32
    %0 = arith.cmpi eq, %arg1, %c0_i32 : i32
    %1 = arith.extui %0 : i1 to i32
    %c0_i32_0 = arith.constant 0 : i32
    %2 = arith.cmpi ne, %1, %c0_i32_0 : i32
    scf.if %2 {
      %cst_10 = arith.constant 0.000000e+00 : f32
      %18 = vector.broadcast %cst_10 : f32 to vector<8x54xf32>
      %c0_11 = arith.constant 0 : index
      %c0_12 = arith.constant 0 : index
      %c0_13 = arith.constant 0 : index
      %19 = vector.load %arg6[%c0_11, %c0_12, %c0_13] : memref<1x8x54xf32, #tpu.memory_space<vmem>>, vector<1x8x54xf32>
      %20 = vector.shape_cast %19 : vector<1x8x54xf32> to vector<8x54xf32>
      %21 = vector.shape_cast %18 : vector<8x54xf32> to vector<1x8x54xf32>
      tpu.vector_store %arg6[%c0_11, %c0_12, %c0_13], %21 {strides = array<i32>} : memref<1x8x54xf32, #tpu.memory_space<vmem>>, vector<1x8x54xf32>,
    } else {
    }
    %c0 = arith.constant 0 : index
    %c0_1 = arith.constant 0 : index
    %3 = vector.load %arg2[%c0, %c0_1] : memref<8x54xf32, #tpu.memory_space<vmem>>, vector<8x54xf32>
    %c0_2 = arith.constant 0 : index
    %c0_3 = arith.constant 0 : index
    %4 = vector.load %arg3[%c0_2, %c0_3] : memref<8x54xf32, #tpu.memory_space<vmem>>, vector<8x54xf32>
    %c0_4 = arith.constant 0 : index
    %c0_5 = arith.constant 0 : index
    %5 = vector.load %arg4[%c0_4, %c0_5] : memref<1x54xf32, #tpu.memory_space<vmem>>, vector<1x54xf32>
    %cst = arith.constant 5.000000e-01 : f32
    %6 = vector.broadcast %cst : f32 to vector<1x54xf32>
    %7 = arith.cmpf ogt, %5, %6 : vector<1x54xf32>
    %c1_i32 = arith.constant 1 : i32
    %8 = arith.muli %arg0, %c1_i32 : i32
    %9 = arith.addi %8, %arg1 : i32
    %c8_i32 = arith.constant 8 : i32
    %10 = arith.muli %9, %c8_i32 : i32
    %c8_i32_6 = arith.constant 8 : i32
    %11 = arith.addi %10, %c8_i32_6 : i32
    %c8_i32_7 = arith.constant 8 : i32
    %12 = arith.cmpi sgt, %11, %c8_i32_7 : i32
    %true = arith.constant true
    %13 = arith.xori %12, %true : i1
    %14 = arith.extui %13 : i1 to i32
    %c0_i32_8 = arith.constant 0 : i32
    %15 = arith.cmpi ne, %14, %c0_i32_8 : i32
    scf.if %15 {
      %c0_10 = arith.constant 0 : index
      %c0_11 = arith.constant 0 : index
      %c0_12 = arith.constant 0 : index
      %18 = vector.load %arg6[%c0_10, %c0_11, %c0_12] : memref<1x8x54xf32, #tpu.memory_space<vmem>>, vector<1x8x54xf32>
      %19 = vector.shape_cast %18 : vector<1x8x54xf32> to vector<8x54xf32>
      %cst_13 = arith.constant 0.000000e+00 : f32
      %20 = vector.broadcast %cst_13 : f32 to vector<8x54xf32>
      %21 = arith.maximumf %3, %20 : vector<8x54xf32>
      %22 = arith.mulf %3, %4 : vector<8x54xf32>
      %23 = arith.subf %21, %22 : vector<8x54xf32>
      %24 = math.absf %3 : vector<8x54xf32>
      %cst_14 = arith.constant 0.000000e+00 : f32
      %25 = vector.broadcast %cst_14 : f32 to vector<8x54xf32>
      %26 = arith.subf %25, %24 : vector<8x54xf32>
      %27 = math.exp %26 : vector<8x54xf32>
      %28 = math.log1p %27 : vector<8x54xf32>
      %29 = arith.addf %23, %28 : vector<8x54xf32>
      %30 = arith.subf %3, %4 : vector<8x54xf32>
      %31 = arith.subf %3, %4 : vector<8x54xf32>
      %32 = arith.mulf %30, %31 : vector<8x54xf32>
      %33 = vector.shape_cast %7 : vector<1x54xi1> to vector<1x54xi1>
      %34 = vector.broadcast %33 : vector<1x54xi1> to vector<8x54xi1>
      %35 = arith.select %34, %29, %32 : vector<8x54xi1>, vector<8x54xf32>
      %cst_15 = arith.constant 1.000000e+00 : f32
      %36 = vector.broadcast %cst_15 : f32 to vector<8x54xf32>
      %37 = arith.cmpf oeq, %4, %36 : vector<8x54xf32>
      %cst_16 = arith.constant 1.000000e+00 : f32
      %cst_17 = arith.constant 0.000000e+00 : f32
      %38 = vector.broadcast %cst_16 : f32 to vector<8x54xf32>
      %39 = vector.broadcast %cst_17 : f32 to vector<8x54xf32>
      %40 = arith.select %37, %38, %39 : vector<8x54xi1>, vector<8x54xf32>
      %41 = arith.truncf %40 : vector<8x54xf32> to vector<8x54xbf16>
      %c0_18 = arith.constant 0 : index
      %c0_19 = arith.constant 0 : index
      %42 = vector.load %arg5[%c0_18, %c0_19] : memref<54x54xbf16, #tpu.memory_space<vmem>>, vector<54x54xbf16>
      %cst_20 = arith.constant dense<0.000000e+00> : vector<8x54xf32>
      %43 = tpu.matmul %41, %42, %cst_20 {dimension_numbers = #tpu.dot_dimension_numbers<[1], [0], [0], [1], [0, 0, 1, 1], [], []>} : vector<8x54xbf16>, vector<54x54xbf16>, vector<8x54xf32> -> vector<8x54xf32>
      %cst_21 = arith.constant 5.000000e-01 : f32
      %44 = vector.broadcast %cst_21 : f32 to vector<8x54xf32>
      %45 = arith.cmpf ogt, %43, %44 : vector<8x54xf32>
      %cst_22 = arith.constant 1.000000e+00 : f32
      %cst_23 = arith.constant 5.000000e-01 : f32
      %46 = vector.broadcast %cst_22 : f32 to vector<8x54xf32>
      %47 = vector.broadcast %cst_23 : f32 to vector<8x54xf32>
      %48 = arith.select %45, %46, %47 : vector<8x54xi1>, vector<8x54xf32>
      %49 = arith.mulf %35, %48 : vector<8x54xf32>
      %50 = arith.addf %19, %49 : vector<8x54xf32>
      %c0_24 = arith.constant 0 : index
      %c0_25 = arith.constant 0 : index
      %c0_26 = arith.constant 0 : index
      %51 = vector.load %arg6[%c0_24, %c0_25, %c0_26] : memref<1x8x54xf32, #tpu.memory_space<vmem>>, vector<1x8x54xf32>
      %52 = vector.shape_cast %51 : vector<1x8x54xf32> to vector<8x54xf32>
      %53 = vector.shape_cast %50 : vector<8x54xf32> to vector<1x8x54xf32>
      tpu.vector_store %arg6[%c0_24, %c0_25, %c0_26], %53 {strides = array<i32>} : memref<1x8x54xf32, #tpu.memory_space<vmem>>, vector<1x8x54xf32>,
    } else {
    }
    %16 = arith.extui %12 : i1 to i32
    %c0_i32_9 = arith.constant 0 : i32
    %17 = arith.cmpi ne, %16, %c0_i32_9 : i32
    scf.if %17 {
      %18 = tpu.iota {dimensions = array<i32: 0>} : vector<8x1xi32>
      %c8_i32_10 = arith.constant 8 : i32
      %19 = arith.subi %c8_i32_10, %10 : i32
      %20 = vector.broadcast %19 : i32 to vector<8x1xi32>
      %21 = arith.cmpi slt, %18, %20 : vector<8x1xi32>
      %c0_11 = arith.constant 0 : index
      %c0_12 = arith.constant 0 : index
      %c0_13 = arith.constant 0 : index
      %22 = vector.load %arg6[%c0_11, %c0_12, %c0_13] : memref<1x8x54xf32, #tpu.memory_space<vmem>>, vector<1x8x54xf32>
      %23 = vector.shape_cast %22 : vector<1x8x54xf32> to vector<8x54xf32>
      %cst_14 = arith.constant 0.000000e+00 : f32
      %24 = vector.shape_cast %21 : vector<8x1xi1> to vector<8x1xi1>
      %25 = vector.broadcast %24 : vector<8x1xi1> to vector<8x54xi1>
      %26 = vector.broadcast %cst_14 : f32 to vector<8x54xf32>
      %27 = arith.select %25, %3, %26 : vector<8x54xi1>, vector<8x54xf32>
      %cst_15 = arith.constant 0.000000e+00 : f32
      %28 = vector.shape_cast %21 : vector<8x1xi1> to vector<8x1xi1>
      %29 = vector.broadcast %28 : vector<8x1xi1> to vector<8x54xi1>
      %30 = vector.broadcast %cst_15 : f32 to vector<8x54xf32>
      %31 = arith.select %29, %4, %30 : vector<8x54xi1>, vector<8x54xf32>
      %cst_16 = arith.constant 0.000000e+00 : f32
      %32 = vector.broadcast %cst_16 : f32 to vector<8x54xf32>
      %33 = arith.maximumf %27, %32 : vector<8x54xf32>
      %34 = arith.mulf %27, %31 : vector<8x54xf32>
      %35 = arith.subf %33, %34 : vector<8x54xf32>
      %36 = math.absf %27 : vector<8x54xf32>
      %cst_17 = arith.constant 0.000000e+00 : f32
      %37 = vector.broadcast %cst_17 : f32 to vector<8x54xf32>
      %38 = arith.subf %37, %36 : vector<8x54xf32>
      %39 = math.exp %38 : vector<8x54xf32>
      %40 = math.log1p %39 : vector<8x54xf32>
      %41 = arith.addf %35, %40 : vector<8x54xf32>
      %42 = arith.subf %27, %31 : vector<8x54xf32>
      %43 = arith.subf %27, %31 : vector<8x54xf32>
      %44 = arith.mulf %42, %43 : vector<8x54xf32>
      %45 = vector.shape_cast %7 : vector<1x54xi1> to vector<1x54xi1>
      %46 = vector.broadcast %45 : vector<1x54xi1> to vector<8x54xi1>
      %47 = arith.select %46, %41, %44 : vector<8x54xi1>, vector<8x54xf32>
      %cst_18 = arith.constant 1.000000e+00 : f32
      %48 = vector.broadcast %cst_18 : f32 to vector<8x54xf32>
      %49 = arith.cmpf oeq, %31, %48 : vector<8x54xf32>
      %cst_19 = arith.constant 1.000000e+00 : f32
      %cst_20 = arith.constant 0.000000e+00 : f32
      %50 = vector.broadcast %cst_19 : f32 to vector<8x54xf32>
      %51 = vector.broadcast %cst_20 : f32 to vector<8x54xf32>
      %52 = arith.select %49, %50, %51 : vector<8x54xi1>, vector<8x54xf32>
      %53 = arith.truncf %52 : vector<8x54xf32> to vector<8x54xbf16>
      %c0_21 = arith.constant 0 : index
      %c0_22 = arith.constant 0 : index
      %54 = vector.load %arg5[%c0_21, %c0_22] : memref<54x54xbf16, #tpu.memory_space<vmem>>, vector<54x54xbf16>
      %cst_23 = arith.constant dense<0.000000e+00> : vector<8x54xf32>
      %55 = tpu.matmul %53, %54, %cst_23 {dimension_numbers = #tpu.dot_dimension_numbers<[1], [0], [0], [1], [0, 0, 1, 1], [], []>} : vector<8x54xbf16>, vector<54x54xbf16>, vector<8x54xf32> -> vector<8x54xf32>
      %cst_24 = arith.constant 5.000000e-01 : f32
      %56 = vector.broadcast %cst_24 : f32 to vector<8x54xf32>
      %57 = arith.cmpf ogt, %55, %56 : vector<8x54xf32>
      %cst_25 = arith.constant 1.000000e+00 : f32
      %cst_26 = arith.constant 5.000000e-01 : f32
      %58 = vector.broadcast %cst_25 : f32 to vector<8x54xf32>
      %59 = vector.broadcast %cst_26 : f32 to vector<8x54xf32>
      %60 = arith.select %57, %58, %59 : vector<8x54xi1>, vector<8x54xf32>
      %61 = arith.mulf %47, %60 : vector<8x54xf32>
      %cst_27 = arith.constant 0.000000e+00 : f32
      %62 = vector.shape_cast %21 : vector<8x1xi1> to vector<8x1xi1>
      %63 = vector.broadcast %62 : vector<8x1xi1> to vector<8x54xi1>
      %64 = vector.broadcast %cst_27 : f32 to vector<8x54xf32>
      %65 = arith.select %63, %61, %64 : vector<8x54xi1>, vector<8x54xf32>
      %66 = arith.addf %23, %65 : vector<8x54xf32>
      %c0_28 = arith.constant 0 : index
      %c0_29 = arith.constant 0 : index
      %c0_30 = arith.constant 0 : index
      %67 = vector.load %arg6[%c0_28, %c0_29, %c0_30] : memref<1x8x54xf32, #tpu.memory_space<vmem>>, vector<1x8x54xf32>
      %68 = vector.shape_cast %67 : vector<1x8x54xf32> to vector<8x54xf32>
      %69 = vector.shape_cast %66 : vector<8x54xf32> to vector<1x8x54xf32>
      tpu.vector_store %arg6[%c0_28, %c0_29, %c0_30], %69 {strides = array<i32>} : memref<1x8x54xf32, #tpu.memory_space<vmem>>, vector<1x8x54xf32>,
    } else {
    }
    return
  }
  func.func @transform_0(%arg0: i32, %arg1: i32) -> (i32, i32) {
    %c1_i32 = arith.constant 1 : i32
    %0 = arith.muli %arg0, %c1_i32 : i32
    %1 = arith.addi %0, %arg1 : i32
    %c0_i32 = arith.constant 0 : i32
    %2 = arith.minsi %1, %c0_i32 : i32
    %c0_i32_0 = arith.constant 0 : i32
    %c0_i32_1 = arith.constant 0 : i32
    return %2, %c0_i32_0 : i32, i32
  }
  func.func @transform_1(%arg0: i32, %arg1: i32) -> (i32, i32) {
    %c1_i32 = arith.constant 1 : i32
    %0 = arith.muli %arg0, %c1_i32 : i32
    %1 = arith.addi %0, %arg1 : i32
    %c0_i32 = arith.constant 0 : i32
    %2 = arith.minsi %1, %c0_i32 : i32
    %c0_i32_0 = arith.constant 0 : i32
    %c0_i32_1 = arith.constant 0 : i32
    return %2, %c0_i32_0 : i32, i32
  }
  func.func @transform_2(%arg0: i32, %arg1: i32) -> (i32, i32) {
    %c0_i32 = arith.constant 0 : i32
    %c0_i32_0 = arith.constant 0 : i32
    %c0_i32_1 = arith.constant 0 : i32
    return %c0_i32, %c0_i32_0 : i32, i32
  }
  func.func @transform_3(%arg0: i32, %arg1: i32) -> (i32, i32) {
    %c0_i32 = arith.constant 0 : i32
    %c0_i32_0 = arith.constant 0 : i32
    %c0_i32_1 = arith.constant 0 : i32
    return %c0_i32, %c0_i32_0 : i32, i32
  }
  func.func @transform_4(%arg0: i32, %arg1: i32) -> (i32, i32, i32) {
    %c0_i32 = arith.constant 0 : i32
    %c0_i32_0 = arith.constant 0 : i32
    %c0_i32_1 = arith.constant 0 : i32
    return %arg0, %c0_i32, %c0_i32_0 : i32, i32, i32
  }
}

</mosaic_0001>

<llo_original>
// kernel: tpu_custom_call.1
$region0: #{tpu_custom_call.1}
  #allocation0 [shape = 'u32[]', space=smem, size = 0x4, offset = 0x4, fixed_abs, tag = 'smem constant byte address 0x4 - core index']
  #allocation1 [shape = 'u32[144,128]{1,0:T(1,128)}', space=vmem, size = 0x12000, scoped, tag = 'internal scratch']
  %s0 = inlined_call_operand.hbm [shape: f32[8,54], index: 0, kind: input, shape index: {}]
  %s1 = inlined_call_operand.hbm [shape: f32[8,54], index: 1, kind: input, shape index: {}]
  %s2 = inlined_call_operand.vmem [shape: f32[1,54], index: 2, kind: input, shape index: {}]
  %s3 = inlined_call_operand.hbm [shape: bf16[54,54], index: 3, kind: input, shape index: {}]
  %s4 = inlined_call_operand.hbm [shape: f32[1,8,54], index: 4, kind: output, shape index: {}]
  %s5 = sld [smem:[#allocation0]]
  $region50: #{tpu_custom_call.1} parent=0
    _
  %s7 = ssub.s32 1, %s5
  %s8 = scalar_select 0, %s7, %s5
  $region1: #{tpu_custom_call.1} parent=0
    #allocation2 [shape = 'u8[4096]{0}', space=vmem, size = 0x1000, scoped, tag = 'input window, operand 0, single buffered']
    #allocation3 [shape = 's32[1]{0}', space=sflag, size = 0x4, scoped, tag = 'scoped memory for tpu_custom_call.1']
    #allocation4 [shape = 's32[1]{0}', space=sflag, size = 0x4, scoped, tag = 'scoped memory for tpu_custom_call.1']
    #allocation5 [shape = 'u8[4096]{0}', space=vmem, size = 0x1000, scoped, tag = 'input window, operand 1, single buffered']
    #allocation6 [shape = 's32[1]{0}', space=sflag, size = 0x4, scoped, tag = 'scoped memory for tpu_custom_call.1']
    #allocation7 [shape = 'u8[14336]{0}', space=vmem, size = 0x3800, scoped, tag = 'input window, operand 3, single buffered']
    #allocation8 [shape = 'u8[4096]{0}', space=vmem, size = 0x1000, scoped, tag = 'output window, operand 0, single buffered']
    %9 = vsyncpa [#allocation3], 0
    %10 = vsyncpa [#allocation6], 0
    %11 = vsyncpa [#allocation4], 0
    // Predicated region
    $region2: #{tpu_custom_call.1} parent=1 // pred_check
      _
    $region3: #{tpu_custom_call.1} parent=1 // pred_check_branch
      %13 = sbr.rel (0) target = $region5
    $region4: #{tpu_custom_call.1} parent=1 // pred_region
      %s14 = sadd.s32 0, 0
      %p15 = scmp.lt.s32.totalorder %s14, 0
      %s16 = scalar_select %p15, %s14, 0
      %s18 = ssub.s32 128, 128
      %19 = vsyncadd [#allocation3], %s18
      %s20 = smul.addr %s16, 128
      %s21 = scalar_lea.hbm %s0, %s20
      %s23 = sshll.u32 [#allocation2], 4
      %s24 = int_to_ptr.vmem [resolvable:$true] %s23
      %26 = dma.hbm_to_vmem [thread:$0]  %s21, 128, %s24, [#allocation3]
    $region5: #{tpu_custom_call.1} parent=1 // pred_fallthru
      _
    // Predicated region
    $region6: #{tpu_custom_call.1} parent=1 // pred_check
      _
    $region7: #{tpu_custom_call.1} parent=1 // pred_check_branch
      %28 = sbr.rel (0) target = $region9
    $region8: #{tpu_custom_call.1} parent=1 // pred_region
      %s29 = sadd.s32 0, 0
      %p30 = scmp.lt.s32.totalorder %s29, 0
      %s31 = scalar_select %p30, %s29, 0
      %s33 = ssub.s32 128, 128
      %34 = vsyncadd [#allocation6], %s33
      %s35 = smul.addr %s31, 128
      %s36 = scalar_lea.hbm %s1, %s35
      %s38 = sshll.u32 [#allocation5], 4
      %s39 = int_to_ptr.vmem [resolvable:$true] %s38
      %41 = dma.hbm_to_vmem [thread:$0]  %s36, 128, %s39, [#allocation6]
    $region9: #{tpu_custom_call.1} parent=1 // pred_fallthru
      _
    // Predicated region
    $region10: #{tpu_custom_call.1} parent=1 // pred_check
      _
    $region11: #{tpu_custom_call.1} parent=1 // pred_check_branch
      %43 = sbr.rel (0) target = $region13
    $region12: #{tpu_custom_call.1} parent=1 // pred_region
      _
    $region13: #{tpu_custom_call.1} parent=1 // pred_fallthru
      _
    // Predicated region
    $region14: #{tpu_custom_call.1} parent=1 // pred_check
      _
    $region15: #{tpu_custom_call.1} parent=1 // pred_check_branch
      %45 = sbr.rel (0) target = $region17
    $region16: #{tpu_custom_call.1} parent=1 // pred_region
      %s47 = ssub.s32 448, 448
      %48 = vsyncadd [#allocation6], %s47
      %s49 = sshll.u32 [#allocation7], 4
      %s50 = int_to_ptr.vmem [resolvable:$true] %s49
      %55 = dma.hbm_to_vmem [thread:$0]  %s3, 448, %s50, [#allocation6], 64, 64, 4
    $region17: #{tpu_custom_call.1} parent=1 // pred_fallthru
      _
    // Predicated region
    $region18: #{tpu_custom_call.1} parent=1 // pred_check
      _
    $region19: #{tpu_custom_call.1} parent=1 // pred_check_branch
      %57 = sbr.rel (0) target = $region21
    $region20: #{tpu_custom_call.1} parent=1 // pred_region
      %58 = dma.done [#allocation3], 128
    $region21: #{tpu_custom_call.1} parent=1 // pred_fallthru
      _
    // Predicated region
    $region22: #{tpu_custom_call.1} parent=1 // pred_check
      _
    $region23: #{tpu_custom_call.1} parent=1 // pred_check_branch
      %60 = sbr.rel (0) target = $region25
    $region24: #{tpu_custom_call.1} parent=1 // pred_region
      %61 = dma.done [#allocation6], 128
    $region25: #{tpu_custom_call.1} parent=1 // pred_fallthru
      _
    // Predicated region
    $region26: #{tpu_custom_call.1} parent=1 // pred_check
      _
    $region27: #{tpu_custom_call.1} parent=1 // pred_check_branch
      %63 = sbr.rel (0) target = $region29
    $region28: #{tpu_custom_call.1} parent=1 // pred_region
      %64 = dma.done [#allocation6], 448
    $region29: #{tpu_custom_call.1} parent=1 // pred_fallthru
      _
    %s65 = sadd.s32 0, 0
    %p66 = scmp.lt.s32.totalorder %s65, 0
    %s67 = scalar_select %p66, %s65, 0
    %s68 = sadd.s32 0, 0
    %p69 = scmp.lt.s32.totalorder %s68, 0
    %s70 = scalar_select %p69, %s68, 0
    %p72 = scmp.eq.s32.totalorder 0, 0
    // Predicated region
    $region30: #{tpu_custom_call.1} parent=1 // pred_check
      %p73 = pneg %p72
    $region31: #{tpu_custom_call.1} parent=1 // pred_check_branch
      %75 = sbr.rel (%p73) target = $region33
    $region32: #{tpu_custom_call.1} parent=1 // pred_region
      %vm76 = vcmask 441344
      %77 = vst.msk [vmem:[#allocation8] sm:$0xff] %vm76, 0.0
    $region33: #{tpu_custom_call.1} parent=1 // pred_fallthru
      _
    %v78 = vld [vmem:[#allocation2] sm:$0xff]
    %v79 = vld [vmem:[#allocation5] sm:$0xff]
    %v80 = vld [vmem:[%s2] sm:$0x1]
    %vm81 = vcmp.gt.f32.partialorder %v80, 0.5
    %s82 = sadd.s32 0, 0
    %s83 = smul.u32 %s82, 8
    %s84 = sadd.s32 %s83, 8
    %p85 = scmp.gt.s32.totalorder %s84, 8
    %p86 = scmp.le.s32.totalorder %s84, 8
    // Predicated region
    $region34: #{tpu_custom_call.1} parent=1 // pred_check
      %p87 = pneg %p86
    $region35: #{tpu_custom_call.1} parent=1 // pred_check_branch
      %89 = sbr.rel (%p87) target = $region37
    $region36: #{tpu_custom_call.1} parent=1 // pred_region
      %v90 = vld [vmem:[#allocation8] sm:$0xff]
      %v91 = vmax.f32 %v78, 0.0
      %v92 = vmul.f32 %v78, %v79
      %v93 = vsub.f32 %v91, %v92
      %v94 = vand.u32 2147483647, %v78
      %v95 = vsub.f32 0.0, %v94
      %v96 = vmul.f32 %v95, 1.442695
      %v97 = vpow.pop %v96
      %v98 = vadd.f32 %v97, 1.0
      %v99 = vlog2.pop %v98
      %v100 = vmul.f32 %v99, 0.6931472
      %v101 = vmul.f32 -0.5, %v97
      %v102 = vadd.f32 %v101, 1.0
      %v103 = vmul.f32 %v102, %v97
      %v104 = vand.u32 2147483647, %v97
      %vm105 = vcmp.lt.f32.partialorder %v104, 0.0004427343
      %v106 = vsel %vm105, %v103, %v100
      %v107 = vadd.f32 %v93, %v106
      %v108 = vsub.f32 %v78, %v79
      %v109 = vmul.f32 %v108, %v108
      %v110 = vsel %vm81, 1, 0
      %v111 = vlaneseq
      %v112 = vshrl.u32 %v111, 7
      %v113 = vsub.s32 0, %v112
      %v114 = vrot.slane %v110, %v113
      %vm115 = vcmp.eq.s32.totalorder %v114, 1
      %v116 = vsel %vm115, %v107, %v109
      %vm117 = vcmp.eq.f32.partialorder %v79, 1.0
      %v118 = vsel %vm117, 1.0, 0.0
      %v119 = vpack.c.bf16 %v118, %v118
      %v120 = vld [vmem:[#allocation7] sm:$0xf]
      %v121 = vld [vmem:[#allocation7 + $0x4] sm:$0xf]
      %v122 = vld [vmem:[#allocation7 + $0x8] sm:$0xf]
      %v123 = vld [vmem:[#allocation7 + $0xc] sm:$0xf]
      %v124 = vld [vmem:[#allocation7 + $0x10] sm:$0xf]
      %v125 = vld [vmem:[#allocation7 + $0x14] sm:$0xf]
      %v126 = vld [vmem:[#allocation7 + $0x18] sm:$0x7]
      %v134 = vunpack.c.l.b16 %v120
      %v135 = vunpack.c.l.b16 %v121
      %v136 = vunpack.c.l.b16 %v122
      %v137 = vunpack.c.l.b16 %v123
      %v138 = vunpack.c.l.b16 %v124
      %v139 = vunpack.c.l.b16 %v125
      %v140 = vunpack.c.l.b16 %v126
      %v141 = vpack.c.b16 %v135, %v134
      %v142 = vpack.c.b16 %v137, %v136
      %v143 = vpack.c.b16 %v139, %v138
      %v144 = vpack.c.b16 %v140, %v140
      %vm148 = vcmask 441344
      %v150 = vsel %vm148, %v119, 0
      %vm152 = vcmask 1042432
      %v154 = vsel %vm152, %v144, 0
      %156 = vmatprep.subr.bf16.mxu0 0
      %157 = vmatpush1.bf16.msra.mxu0 %v141
      %158 = vmatprep.subr.bf16.mxu0 0
      %159 = vmatpush1.bf16.msra.mxu0 %v142
      %160 = vmatprep.subr.bf16.mxu0 0
      %161 = vmatpush1.bf16.msra.mxu0 %v143
      %162 = vmatprep.subr.bf16.mxu0 0
      %163 = vmatpush1.bf16.msra.mxu0 %v154
      %164 = vmatprep.subr.bf16.mxu0 0
      %165 = vmatpush1.bf16.msra.mxu0 0
      %166 = vmatprep.subr.bf16.mxu0 0
      %167 = vmatpush1.bf16.msra.mxu0 0
      %168 = vmatprep.subr.bf16.mxu0 0
      %169 = vmatpush1.bf16.msra.mxu0 0
      %170 = vmatprep.subr.bf16.mxu0 0
      %171 = vmatpush1.bf16.msra.mxu0 0
      %172 = vmatprep.subr.bf16.mxu0 0
      %173 = vmatpush1.bf16.msra.mxu0 0
      %174 = vmatprep.subr.bf16.mxu0 0
      %175 = vmatpush1.bf16.msra.mxu0 0
      %176 = vmatprep.subr.bf16.mxu0 0
      %177 = vmatpush1.bf16.msra.mxu0 0
      %178 = vmatprep.subr.bf16.mxu0 0
      %179 = vmatpush1.bf16.msra.mxu0 0
      %180 = vmatprep.subr.bf16.mxu0 0
      %181 = vmatpush1.bf16.msra.mxu0 0
      %182 = vmatprep.subr.bf16.mxu0 0
      %183 = vmatpush1.bf16.msra.mxu0 0
      %184 = vmatprep.subr.bf16.mxu0 0
      %185 = vmatpush1.bf16.msra.mxu0 0
      %186 = vmatprep.subr.bf16.mxu0 0
      %187 = vmatpush1.bf16.msra.mxu0 0
      %188 = vmatprep.mubr.bf16.mxu0 0
      %189 = vmatmul.mubr.bf16.gmra.mrb[0].mxu0 %v150
      %v190 = vpop.f32.mrb[0].mxu0
      %v191 = vadd.f32 0.0, %v190
      %v192 = vpop.f32.mrb[0].mxu0
      %v193 = vpop.f32.mrb[0].mxu0
      %v194 = vpop.f32.mrb[0].mxu0
      %195 = vdwg.mxu0
      %vm196 = vcmp.gt.f32.partialorder %v191, 0.5
      %v197 = vsel %vm196, 1.0, 0.5
      %v198 = vmul.f32 %v116, %v197
      %v199 = vadd.f32 %v90, %v198
      %200 = vst.msk [vmem:[#allocation8] sm:$0xff] %vm148, %v199
    $region37: #{tpu_custom_call.1} parent=1 // pred_fallthru
      _
    // Predicated region
    $region38: #{tpu_custom_call.1} parent=1 // pred_check
      %p201 = pneg %p85
    $region39: #{tpu_custom_call.1} parent=1 // pred_check_branch
      %203 = sbr.rel (%p201) target = $region41
    $region40: #{tpu_custom_call.1} parent=1 // pred_region
      %v204 = vlaneseq
      %v205 = vshrl.u32 %v204, 7
      %s206 = ssub.s32 8, %s83
      %v207 = vstv %s206
      %vm208 = vcmp.lt.s32.totalorder %v205, %v207
      %v209 = vld [vmem:[#allocation8] sm:$0xff]
      %v210 = vsel %vm208, 1, 0
      %vm211 = vcmp.eq.s32.totalorder %v210, 1
      %v212 = vsel %vm211, %v78, 0.0
      %v213 = vsel %vm211, %v79, 0.0
      %v214 = vmax.f32 %v212, 0.0
      %v215 = vmul.f32 %v212, %v213
      %v216 = vsub.f32 %v214, %v215
      %v217 = vand.u32 2147483647, %v212
      %v218 = vsub.f32 0.0, %v217
      %v219 = vmul.f32 %v218, 1.442695
      %v220 = vpow.pop %v219
      %v221 = vadd.f32 %v220, 1.0
      %v222 = vlog2.pop %v221
      %v223 = vmul.f32 %v222, 0.6931472
      %v224 = vmul.f32 -0.5, %v220
      %v225 = vadd.f32 %v224, 1.0
      %v226 = vmul.f32 %v225, %v220
      %v227 = vand.u32 2147483647, %v220
      %vm228 = vcmp.lt.f32.partialorder %v227, 0.0004427343
      %v229 = vsel %vm228, %v226, %v223
      %v230 = vadd.f32 %v216, %v229
      %v231 = vsub.f32 %v212, %v213
      %v232 = vmul.f32 %v231, %v231
      %v233 = vsel %vm81, 1, 0
      %v234 = vlaneseq
      %v235 = vshrl.u32 %v234, 7
      %v236 = vsub.s32 0, %v235
      %v237 = vrot.slane %v233, %v236
      %vm238 = vcmp.eq.s32.totalorder %v237, 1
      %v239 = vsel %vm238, %v230, %v232
      %vm240 = vcmp.eq.f32.partialorder %v213, 1.0
      %v241 = vsel %vm240, 1.0, 0.0
      %v242 = vpack.c.bf16 %v241, %v241
      %v243 = vld [vmem:[#allocation7] sm:$0xf]
      %v244 = vld [vmem:[#allocation7 + $0x4] sm:$0xf]
      %v245 = vld [vmem:[#allocation7 + $0x8] sm:$0xf]
      %v246 = vld [vmem:[#allocation7 + $0xc] sm:$0xf]
      %v247 = vld [vmem:[#allocation7 + $0x10] sm:$0xf]
      %v248 = vld [vmem:[#allocation7 + $0x14] sm:$0xf]
      %v249 = vld [vmem:[#allocation7 + $0x18] sm:$0x7]
      %v257 = vunpack.c.l.b16 %v243
      %v258 = vunpack.c.l.b16 %v244
      %v259 = vunpack.c.l.b16 %v245
      %v260 = vunpack.c.l.b16 %v246
      %v261 = vunpack.c.l.b16 %v247
      %v262 = vunpack.c.l.b16 %v248
      %v263 = vunpack.c.l.b16 %v249
      %v264 = vpack.c.b16 %v258, %v257
      %v265 = vpack.c.b16 %v260, %v259
      %v266 = vpack.c.b16 %v262, %v261
      %v267 = vpack.c.b16 %v263, %v263
      %vm271 = vcmask 441344
      %v273 = vsel %vm271, %v242, 0
      %vm275 = vcmask 1042432
      %v277 = vsel %vm275, %v267, 0
      %279 = vmatprep.subr.bf16.mxu0 0
      %280 = vmatpush1.bf16.msra.mxu0 %v264
      %281 = vmatprep.subr.bf16.mxu0 0
      %282 = vmatpush1.bf16.msra.mxu0 %v265
      %283 = vmatprep.subr.bf16.mxu0 0
      %284 = vmatpush1.bf16.msra.mxu0 %v266
      %285 = vmatprep.subr.bf16.mxu0 0
      %286 = vmatpush1.bf16.msra.mxu0 %v277
      %287 = vmatprep.subr.bf16.mxu0 0
      %288 = vmatpush1.bf16.msra.mxu0 0
      %289 = vmatprep.subr.bf16.mxu0 0
      %290 = vmatpush1.bf16.msra.mxu0 0
      %291 = vmatprep.subr.bf16.mxu0 0
      %292 = vmatpush1.bf16.msra.mxu0 0
      %293 = vmatprep.subr.bf16.mxu0 0
      %294 = vmatpush1.bf16.msra.mxu0 0
      %295 = vmatprep.subr.bf16.mxu0 0
      %296 = vmatpush1.bf16.msra.mxu0 0
      %297 = vmatprep.subr.bf16.mxu0 0
      %298 = vmatpush1.bf16.msra.mxu0 0
      %299 = vmatprep.subr.bf16.mxu0 0
      %300 = vmatpush1.bf16.msra.mxu0 0
      %301 = vmatprep.subr.bf16.mxu0 0
      %302 = vmatpush1.bf16.msra.mxu0 0
      %303 = vmatprep.subr.bf16.mxu0 0
      %304 = vmatpush1.bf16.msra.mxu0 0
      %305 = vmatprep.subr.bf16.mxu0 0
      %306 = vmatpush1.bf16.msra.mxu0 0
      %307 = vmatprep.subr.bf16.mxu0 0
      %308 = vmatpush1.bf16.msra.mxu0 0
      %309 = vmatprep.subr.bf16.mxu0 0
      %310 = vmatpush1.bf16.msra.mxu0 0
      %311 = vmatprep.mubr.bf16.mxu0 0
      %312 = vmatmul.mubr.bf16.gmra.mrb[0].mxu0 %v273
      %v313 = vpop.f32.mrb[0].mxu0
      %v314 = vadd.f32 0.0, %v313
      %v315 = vpop.f32.mrb[0].mxu0
      %v316 = vpop.f32.mrb[0].mxu0
      %v317 = vpop.f32.mrb[0].mxu0
      %318 = vdwg.mxu0
      %vm319 = vcmp.gt.f32.partialorder %v314, 0.5
      %v320 = vsel %vm319, 1.0, 0.5
      %v321 = vmul.f32 %v239, %v320
      %v322 = vsel %vm211, %v321, 0.0
      %v323 = vadd.f32 %v209, %v322
      %324 = vst.msk [vmem:[#allocation8] sm:$0xff] %vm271, %v323
    $region41: #{tpu_custom_call.1} parent=1 // pred_fallthru
      _
    // Predicated region
    $region42: #{tpu_custom_call.1} parent=1 // pred_check
      _
    $region43: #{tpu_custom_call.1} parent=1 // pred_check_branch
      %326 = sbr.rel (0) target = $region45
    $region44: #{tpu_custom_call.1} parent=1 // pred_region
      %s328 = ssub.s32 128, 128
      %329 = vsyncadd [#allocation4], %s328
      %s331 = sshll.u32 [#allocation8], 4
      %s332 = int_to_ptr.vmem [resolvable:$true] %s331
      %334 = dma.vmem_to_hbm [thread:$0]  %s332, 128, %s4, [#allocation4]
    $region45: #{tpu_custom_call.1} parent=1 // pred_fallthru
      _
    // Predicated region
    $region46: #{tpu_custom_call.1} parent=1 // pred_check
      _
    $region47: #{tpu_custom_call.1} parent=1 // pred_check_branch
      %336 = sbr.rel (0) target = $region49
    $region48: #{tpu_custom_call.1} parent=1 // pred_region
      %337 = dma.done [#allocation4], 128
    $region49: #{tpu_custom_call.1} parent=1 // pred_fallthru
      _
    %338 = vsyncpa [#allocation3], 1
    %339 = vsyncpa [#allocation6], 1
    %340 = vsyncpa [#allocation4], 1

</llo_original>
